<compile_context>
chip_gen: v5e
topology: v5e:2x2
jax: 0.10.0
libtpu: 0.0.40
codegen_flags: <defaults>
</compile_context>

<pallas_src>
import functools

import jax
import jax.numpy as jnp
from jax.experimental import pallas as pl
from jax.experimental.pallas import tpu as pltpu

EPS = 1e-5
_LANES = 128
_SUBLANES = 8
_TILE_ELEMS = _SUBLANES * _LANES        # elements per (8,128) vreg tile
_TARGET_BLOCK_TILES = 1024              # 1024 tiles * 4 KiB = 4 MiB per f32 block
_NUM_CORES = 2                          # v7x has 2 TCs; harmless on 1-TC chips


def _dice_partial_kernel(p_ref, t_ref, inter_ref, union_ref, *,
                         blk_tiles, blocks_per_core, n_tiles, ragged):
    """Grid = (core, block).  Each core accumulates into its own (1,8,128) slabs."""
    c = pl.program_id(0)
    k = pl.program_id(1)

    @pl.when(k == 0)
    def _():
        inter_ref[...] = jnp.zeros_like(inter_ref)
        union_ref[...] = jnp.zeros_like(union_ref)

    # Cast to f32 in-kernel; sigmoid via a single tanh EUP op.
    pre = 0.5 * (jnp.tanh(0.5 * p_ref[...].astype(jnp.float32)) + 1.0)
    tar = t_ref[...].astype(jnp.float32)

    inter = pre * tar
    union = pre + tar

    if not ragged:
        # Fast path: every block is fully in-bounds, no masking ever.
        inter_ref[...] += jnp.sum(inter, axis=0, keepdims=True)
        union_ref[...] += jnp.sum(union, axis=0, keepdims=True)
    else:
        start_tile = (c * blocks_per_core + k) * blk_tiles
        is_full = start_tile + blk_tiles <= n_tiles

        @pl.when(is_full)
        def _():
            inter_ref[...] += jnp.sum(inter, axis=0, keepdims=True)
            union_ref[...] += jnp.sum(union, axis=0, keepdims=True)

        @pl.when(jnp.logical_not(is_full))
        def _():
            # Per-tile mask (one iota over the leading axis).  jnp.where is a
            # select, so NaN/garbage in the out-of-bounds tiles cannot leak.
            tile_ids = jax.lax.broadcasted_iota(jnp.int32, inter.shape, 0)
            mask = (tile_ids + start_tile) < n_tiles
            inter_ref[...] += jnp.sum(jnp.where(mask, inter, 0.0),
                                      axis=0, keepdims=True)
            union_ref[...] += jnp.sum(jnp.where(mask, union, 0.0),
                                      axis=0, keepdims=True)


def dice_loss(predict, target, *, block_tiles=_TARGET_BLOCK_TILES):
    assert predict.shape == target.shape, \
        "the size of predict and target must be equal."

    p = predict.reshape(-1)   # free bitcast-reshape, no dtype cast
    t = target.reshape(-1)
    total = p.shape[0]

    aligned = (total // _TILE_ELEMS) * _TILE_ELEMS
    n_tiles = aligned // _TILE_ELEMS

    inter_sum = jnp.float32(0.0)
    union_sum = jnp.float32(0.0)

    if n_tiles > 0:
        if aligned != total:
            # TODO(synk): the prefix slice may materialize an HBM copy at the
            # pallas_call boundary; callers should prefer numel % 1024 == 0.
            p_main, t_main = p[:aligned], t[:aligned]
        else:
            p_main, t_main = p, t

        p3 = p_main.reshape(n_tiles, _SUBLANES, _LANES)
        t3 = t_main.reshape(n_tiles, _SUBLANES, _LANES)

        ncores = _NUM_CORES if n_tiles >= _NUM_CORES else 1
        tiles_per_core = pl.cdiv(n_tiles, ncores)
        blk = min(block_tiles, tiles_per_core)
        blocks_per_core = pl.cdiv(tiles_per_core, blk)
        ragged = (ncores * blocks_per_core * blk) != n_tiles
        last_blk = pl.cdiv(n_tiles, blk) - 1

        def in_map(c, k):
            # Clamp so a trailing empty block re-reads valid data (its
            # contribution is zeroed by the in-kernel mask).
            return (jnp.minimum(c * blocks_per_core + k, last_blk), 0, 0)

        kernel = functools.partial(
            _dice_partial_kernel,
            blk_tiles=blk, blocks_per_core=blocks_per_core,
            n_tiles=n_tiles, ragged=ragged)

        in_bytes = p3.size * p3.dtype.itemsize + t3.size * t3.dtype.itemsize
        cost = pl.CostEstimate(flops=5 * aligned, transcendentals=aligned,
                               bytes_accessed=in_bytes
                               + 2 * ncores * _TILE_ELEMS * 4)

        inter_parts, union_parts = pl.pallas_call(
            kernel,
            out_shape=(
                jax.ShapeDtypeStruct((ncores, _SUBLANES, _LANES), jnp.float32),
                jax.ShapeDtypeStruct((ncores, _SUBLANES, _LANES), jnp.float32),
            ),
            grid_spec=pltpu.PrefetchScalarGridSpec(
                num_scalar_prefetch=0,
                grid=(ncores, blocks_per_core),
                in_specs=[
                    pl.BlockSpec((blk, _SUBLANES, _LANES), in_map),
                    pl.BlockSpec((blk, _SUBLANES, _LANES), in_map),
                ],
                out_specs=[
                    pl.BlockSpec((1, _SUBLANES, _LANES), lambda c, k: (c, 0, 0)),
                    pl.BlockSpec((1, _SUBLANES, _LANES), lambda c, k: (c, 0, 0)),
                ],
            ),
            compiler_params=pltpu.CompilerParams(
                dimension_semantics=("parallel", "arbitrary"),
                vmem_limit_bytes=48 * 1024 * 1024),
            cost_estimate=cost,
        )(p3, t3)

        inter_sum = inter_sum + jnp.sum(inter_parts)
        union_sum = union_sum + jnp.sum(union_parts)

    if aligned != total:
        # <1024-element ragged tail handled with plain jnp (negligible cost).
        p_tail = p[aligned:].astype(jnp.float32)
        t_tail = t[aligned:].astype(jnp.float32)
        pre_tail = jax.nn.sigmoid(p_tail)
        inter_sum = inter_sum + jnp.sum(pre_tail * t_tail)
        union_sum = union_sum + jnp.sum(pre_tail + t_tail)

    return 1.0 - 2.0 * (inter_sum + EPS) / (union_sum + EPS)


def _dice_loss_ref(predict, target):
    num = predict.shape[0]
    pre = jax.nn.sigmoid(predict.astype(jnp.float32)).reshape(num, -1)
    tar = target.astype(jnp.float32).reshape(num, -1)
    inter = (pre * tar).sum(-1).sum()
    union = (pre + tar).sum(-1).sum()
    return 1.0 - 2.0 * (inter + EPS) / (union + EPS)


if __name__ == "__main__":
    key = jax.random.PRNGKey(0)
    k1, k2 = jax.random.split(key)

    # NCHW inputs, as the PyTorch module would receive (numel % 1024 == 0 path,
    # exercises the 2-core split with one full block per core).
    predict = jax.random.normal(k1, (2, 4, 16, 16), dtype=jnp.float32)
    target = (jax.random.uniform(k2, (2, 4, 16, 16)) > 0.5).astype(jnp.float32)

    score = jax.block_until_ready(dice_loss(predict, target))
    ref = _dice_loss_ref(predict, target)
    assert jnp.allclose(score, ref, atol=1e-5, rtol=1e-5), (score, ref)

    # Ragged path: 2*3*25*25 = 3750 elems -> 3 full tiles through the kernel
    # (partial last block masked in-kernel) + a 678-element tail outside.
    p2 = jax.random.normal(k1, (2, 3, 25, 25), dtype=jnp.float32)
    t2 = (jax.random.uniform(k2, (2, 3, 25, 25)) > 0.5).astype(jnp.float32)
    s2 = jax.block_until_ready(dice_loss(p2, t2))
    r2 = _dice_loss_ref(p2, t2)
    assert jnp.allclose(s2, r2, atol=1e-5, rtol=1e-5), (s2, r2)

    print("KERNEL_OK")
</pallas_src>

<mosaic_0001>
module attributes {stable_mosaic.version = 11 : i64} {
  func.func @_dice_partial_kernel(%arg0: i32, %arg1: i32, %arg2: memref<1x8x128xf32, #tpu.memory_space<vmem>>, %arg3: memref<1x8x128xf32, #tpu.memory_space<vmem>>, %arg4: memref<1x8x128xf32, #tpu.memory_space<vmem>>, %arg5: memref<1x8x128xf32, #tpu.memory_space<vmem>>) attributes {dimension_semantics = [#tpu.dimension_semantics<parallel>, #tpu.dimension_semantics<arbitrary>], iteration_bounds = array<i64: 2, 1>, scalar_prefetch = 0 : i64, scratch_operands = 0 : i64, tpu.core_type = #tpu.core_type<tc>, window_params = [{transform_indices = @transform_0, window_bounds = array<i64: 1, 8, 128>}, {transform_indices = @transform_1, window_bounds = array<i64: 1, 8, 128>}, {transform_indices = @transform_2, window_bounds = array<i64: 1, 8, 128>}, {transform_indices = @transform_3, window_bounds = array<i64: 1, 8, 128>}]} {
    %c0_i32 = arith.constant 0 : i32
    %0 = arith.cmpi eq, %arg1, %c0_i32 : i32
    %1 = arith.extui %0 : i1 to i32
    %c0_i32_0 = arith.constant 0 : i32
    %2 = arith.cmpi ne, %1, %c0_i32_0 : i32
    scf.if %2 {
      %cst_22 = arith.constant 0.000000e+00 : f32
      %24 = vector.broadcast %cst_22 : f32 to vector<1x8x128xf32>
      %c0_23 = arith.constant 0 : index
      %c0_24 = arith.constant 0 : index
      %c0_25 = arith.constant 0 : index
      %25 = vector.load %arg4[%c0_23, %c0_24, %c0_25] : memref<1x8x128xf32, #tpu.memory_space<vmem>>, vector<1x8x128xf32>
      tpu.vector_store %arg4[%c0_23, %c0_24, %c0_25], %24 {strides = array<i32>} : memref<1x8x128xf32, #tpu.memory_space<vmem>>, vector<1x8x128xf32>,
      %cst_26 = arith.constant 0.000000e+00 : f32
      %26 = vector.broadcast %cst_26 : f32 to vector<1x8x128xf32>
      %c0_27 = arith.constant 0 : index
      %c0_28 = arith.constant 0 : index
      %c0_29 = arith.constant 0 : index
      %27 = vector.load %arg5[%c0_27, %c0_28, %c0_29] : memref<1x8x128xf32, #tpu.memory_space<vmem>>, vector<1x8x128xf32>
      tpu.vector_store %arg5[%c0_27, %c0_28, %c0_29], %26 {strides = array<i32>} : memref<1x8x128xf32, #tpu.memory_space<vmem>>, vector<1x8x128xf32>,
    } else {
    }
    %c0 = arith.constant 0 : index
    %c0_1 = arith.constant 0 : index
    %c0_2 = arith.constant 0 : index
    %3 = vector.load %arg2[%c0, %c0_1, %c0_2] : memref<1x8x128xf32, #tpu.memory_space<vmem>>, vector<1x8x128xf32>
    %cst = arith.constant 5.000000e-01 : f32
    %4 = vector.broadcast %cst : f32 to vector<1x8x128xf32>
    %5 = arith.mulf %4, %3 : vector<1x8x128xf32>
    %6 = math.tanh %5 : vector<1x8x128xf32>
    %cst_3 = arith.constant 1.000000e+00 : f32
    %7 = vector.broadcast %cst_3 : f32 to vector<1x8x128xf32>
    %8 = arith.addf %6, %7 : vector<1x8x128xf32>
    %cst_4 = arith.constant 5.000000e-01 : f32
    %9 = vector.broadcast %cst_4 : f32 to vector<1x8x128xf32>
    %10 = arith.mulf %9, %8 : vector<1x8x128xf32>
    %c0_5 = arith.constant 0 : index
    %c0_6 = arith.constant 0 : index
    %c0_7 = arith.constant 0 : index
    %11 = vector.load %arg3[%c0_5, %c0_6, %c0_7] : memref<1x8x128xf32, #tpu.memory_space<vmem>>, vector<1x8x128xf32>
    %12 = arith.mulf %10, %11 : vector<1x8x128xf32>
    %13 = arith.addf %10, %11 : vector<1x8x128xf32>
    %c0_8 = arith.constant 0 : index
    %c0_9 = arith.constant 0 : index
    %c0_10 = arith.constant 0 : index
    %14 = vector.load %arg4[%c0_8, %c0_9, %c0_10] : memref<1x8x128xf32, #tpu.memory_space<vmem>>, vector<1x8x128xf32>
    %cst_11 = arith.constant dense<0.000000e+00> : vector<8x128xf32>
    %15 = vector.multi_reduction <add>, %12, %cst_11 [0] : vector<1x8x128xf32> to vector<8x128xf32>
    %16 = vector.shape_cast %15 : vector<8x128xf32> to vector<1x8x128xf32>
    %17 = arith.addf %14, %16 : vector<1x8x128xf32>
    %c0_12 = arith.constant 0 : index
    %c0_13 = arith.constant 0 : index
    %c0_14 = arith.constant 0 : index
    %18 = vector.load %arg4[%c0_12, %c0_13, %c0_14] : memref<1x8x128xf32, #tpu.memory_space<vmem>>, vector<1x8x128xf32>
    tpu.vector_store %arg4[%c0_12, %c0_13, %c0_14], %17 {strides = array<i32>} : memref<1x8x128xf32, #tpu.memory_space<vmem>>, vector<1x8x128xf32>,
    %c0_15 = arith.constant 0 : index
    %c0_16 = arith.constant 0 : index
    %c0_17 = arith.constant 0 : index
    %19 = vector.load %arg5[%c0_15, %c0_16, %c0_17] : memref<1x8x128xf32, #tpu.memory_space<vmem>>, vector<1x8x128xf32>
    %cst_18 = arith.constant dense<0.000000e+00> : vector<8x128xf32>
    %20 = vector.multi_reduction <add>, %13, %cst_18 [0] : vector<1x8x128xf32> to vector<8x128xf32>
    %21 = vector.shape_cast %20 : vector<8x128xf32> to vector<1x8x128xf32>
    %22 = arith.addf %19, %21 : vector<1x8x128xf32>
    %c0_19 = arith.constant 0 : index
    %c0_20 = arith.constant 0 : index
    %c0_21 = arith.constant 0 : index
    %23 = vector.load %arg5[%c0_19, %c0_20, %c0_21] : memref<1x8x128xf32, #tpu.memory_space<vmem>>, vector<1x8x128xf32>
    tpu.vector_store %arg5[%c0_19, %c0_20, %c0_21], %22 {strides = array<i32>} : memref<1x8x128xf32, #tpu.memory_space<vmem>>, vector<1x8x128xf32>,
    return
  }
  func.func @transform_0(%arg0: i32, %arg1: i32) -> (i32, i32, i32) {
    %c1_i32 = arith.constant 1 : i32
    %0 = arith.muli %arg0, %c1_i32 : i32
    %1 = arith.addi %0, %arg1 : i32
    %c1_i32_0 = arith.constant 1 : i32
    %2 = arith.minsi %1, %c1_i32_0 : i32
    %c0_i32 = arith.constant 0 : i32
    %c0_i32_1 = arith.constant 0 : i32
    %c0_i32_2 = arith.constant 0 : i32
    return %2, %c0_i32, %c0_i32_1 : i32, i32, i32
  }
  func.func @transform_1(%arg0: i32, %arg1: i32) -> (i32, i32, i32) {
    %c1_i32 = arith.constant 1 : i32
    %0 = arith.muli %arg0, %c1_i32 : i32
    %1 = arith.addi %0, %arg1 : i32
    %c1_i32_0 = arith.constant 1 : i32
    %2 = arith.minsi %1, %c1_i32_0 : i32
    %c0_i32 = arith.constant 0 : i32
    %c0_i32_1 = arith.constant 0 : i32
    %c0_i32_2 = arith.constant 0 : i32
    return %2, %c0_i32, %c0_i32_1 : i32, i32, i32
  }
  func.func @transform_2(%arg0: i32, %arg1: i32) -> (i32, i32, i32) {
    %c0_i32 = arith.constant 0 : i32
    %c0_i32_0 = arith.constant 0 : i32
    %c0_i32_1 = arith.constant 0 : i32
    return %arg0, %c0_i32, %c0_i32_0 : i32, i32, i32
  }
  func.func @transform_3(%arg0: i32, %arg1: i32) -> (i32, i32, i32) {
    %c0_i32 = arith.constant 0 : i32
    %c0_i32_0 = arith.constant 0 : i32
    %c0_i32_1 = arith.constant 0 : i32
    return %arg0, %c0_i32, %c0_i32_0 : i32, i32, i32
  }
}

</mosaic_0001>

<llo_original>
// kernel: tpu_custom_call.1
$region0: #{tpu_custom_call.1}
  #allocation0 [shape = 'u32[]', space=smem, size = 0x4, offset = 0x4, fixed_abs, tag = 'smem constant byte address 0x4 - core index']
  #allocation1 [shape = 'u32[72,128]{1,0:T(1,128)}', space=vmem, size = 0x9000, scoped, tag = 'internal scratch']
  %s0 = inlined_call_operand.hbm [shape: f32[2,8,128], index: 0, kind: input, shape index: {}]
  %s1 = inlined_call_operand.hbm [shape: f32[2,8,128], index: 1, kind: input, shape index: {}]
  %s2 = inlined_call_operand.hbm [shape: f32[2,8,128], index: 2, kind: output, shape index: {0}]
  %s3 = inlined_call_operand.hbm [shape: f32[2,8,128], index: 3, kind: output, shape index: {1}]
  %4 = xla_tuple %s2, %s3
  %s5 = sld [smem:[#allocation0]]
  $region61: #{tpu_custom_call.1} parent=0
    _
  %s7 = ssub.s32 1, %s5
  %s8 = scalar_select 0, %s7, %s5
  $region1: #{tpu_custom_call.1} parent=0
    #allocation2 [shape = 'u8[8192]{0}', space=vmem, size = 0x2000, scoped, tag = 'input window, operand 0']
    #allocation3 [shape = 's32[2]{0}', space=sflag, size = 0x8, scoped, tag = 'scoped memory for tpu_custom_call.1']
    #allocation4 [shape = 's32[2]{0}', space=sflag, size = 0x8, scoped, tag = 'scoped memory for tpu_custom_call.1']
    #allocation5 [shape = 'u8[8192]{0}', space=vmem, size = 0x2000, scoped, tag = 'input window, operand 1']
    #allocation6 [shape = 's32[2]{0}', space=sflag, size = 0x8, scoped, tag = 'scoped memory for tpu_custom_call.1']
    #allocation7 [shape = 'u8[8192]{0}', space=vmem, size = 0x2000, scoped, tag = 'output window, operand 0']
    #allocation8 [shape = 'u8[8192]{0}', space=vmem, size = 0x2000, scoped, tag = 'output window, operand 1']
    #allocation9 [shape = 's32[2]{0}', space=sflag, size = 0x8, scoped, tag = 'scoped memory for tpu_custom_call.1']
    %9 = vsyncpa [#allocation3], 0
    %s10 = scalar_lea.sflag [#allocation3], 1
    %11 = vsyncpa %s10, 0
    %12 = vsyncpa [#allocation6], 0
    %s13 = scalar_lea.sflag [#allocation6], 1
    %14 = vsyncpa %s13, 0
    %15 = vsyncpa [#allocation4], 0
    %s16 = scalar_lea.sflag [#allocation4], 1
    %17 = vsyncpa %s16, 0
    %18 = vsyncpa [#allocation9], 0
    %s19 = scalar_lea.sflag [#allocation9], 1
    %20 = vsyncpa %s19, 0
    loop: start=0, step=1, limit=4
    $region2: #{tpu_custom_call.1} parent=1 // loop_pre_header
      _
    $region3: #{tpu_custom_call.1} parent=1 // loop_header
      %s22 = sphi 0, %s26
      %p23 = scmp.ge.s32.totalorder %s22, 4
      %s29 = sphi 0, %s41
      %s30 = sphi 0, %s37
      %s31 = sphi 0, %s29
      %s32 = sphi 0, %s30
      %s33 = sphi 0, %s31
      %s34 = sphi 0, %s32
      %s50 = sphi 0, %s52
      %s53 = sphi 0, %s50
      %s54 = sphi 0, %s53
      %s70 = sphi 0, %s54
      %s82 = sphi 0, %s84
      %s85 = sphi 0, %s82
      %s86 = sphi 0, %s85
      %s102 = sphi 0, %s86
      %s108 = sphi 0, %s110
      %s111 = sphi 0, %s108
      %s112 = sphi 0, %s111
      %s128 = sphi 0, %s112
      %s134 = sphi 0, %s136
      %s137 = sphi 0, %s134
      %s138 = sphi 0, %s137
      %s154 = sphi 0, %s138
    $region4: #{tpu_custom_call.1} parent=1 // loop_header_branch
      %25 = sbr.rel (%p23) target = $region8
    $region5: #{tpu_custom_call.1} parent=1 // loop_body
      %s27 = ssub.s32 %s22, 1
      %s28 = ssub.s32 %s22, 2
      %s35 = sadd.s32 1, %s30
      %p36 = scmp.ge.s32.totalorder %s35, 1
      %s37 = scalar_select %p36, 0, %s35
      %s38 = sadd.s32 1, %s29
      %s39 = scalar_select %p36, %s38, %s29
      %p40 = scmp.ge.s32.totalorder %s39, 2
      %s41 = scalar_select %p40, 0, %s39
      %s42 = sadd.s32 %s29, %s30
      %p43 = scmp.lt.s32.totalorder %s42, 1
      %s44 = scalar_select %p43, %s42, 1
      %s45 = sadd.s32 %s41, %s37
      %p46 = scmp.lt.s32.totalorder %s45, 1
      %s47 = scalar_select %p46, %s45, 1
      %s48 = ssub.s32 %s44, %s47
      %p49 = scmp.eq.s32.totalorder %s48, 0
      %s51 = sadd.s32 %s50, 1
      %s52 = scalar_select %p49, %s50, %s51
      %p55 = pneg %p49
      %p56 = scmp.eq.s32.totalorder %s22, 1
      %p57 = por %p55, %p56
      %p58 = scmp.ne.s32.totalorder %s50, %s53
      %p59 = scmp.eq.s32.totalorder %s22, 0
      %p60 = por %p58, %p59
      %p61 = scmp.ne.s32.totalorder %s50, %s53
      %p62 = scmp.eq.s32.totalorder %s27, 1
      %p63 = por %p61, %p62
      %p64 = scmp.ne.s32.totalorder %s53, %s54
      %p65 = scmp.eq.s32.totalorder %s27, 0
      %p66 = por %p64, %p65
      %p67 = scmp.ne.s32.totalorder %s53, %s54
      %p68 = scmp.eq.s32.totalorder %s28, 1
      %p69 = por %p67, %p68
      %p71 = scmp.ne.s32.totalorder %s54, %s70
      %p72 = scmp.eq.s32.totalorder %s28, 0
      %p73 = por %p71, %p72
      %s74 = sadd.s32 %s29, %s30
      %p75 = scmp.lt.s32.totalorder %s74, 1
      %s76 = scalar_select %p75, %s74, 1
      %s77 = sadd.s32 %s41, %s37
      %p78 = scmp.lt.s32.totalorder %s77, 1
      %s79 = scalar_select %p78, %s77, 1
      %s80 = ssub.s32 %s76, %s79
      %p81 = scmp.eq.s32.totalorder %s80, 0
      %s83 = sadd.s32 %s82, 1
      %s84 = scalar_select %p81, %s82, %s83
      %p87 = pneg %p81
      %p88 = scmp.eq.s32.totalorder %s22, 1
      %p89 = por %p87, %p88
      %p90 = scmp.ne.s32.totalorder %s82, %s85
      %p91 = scmp.eq.s32.totalorder %s22, 0
      %p92 = por %p90, %p91
      %p93 = scmp.ne.s32.totalorder %s82, %s85
      %p94 = scmp.eq.s32.totalorder %s27, 1
      %p95 = por %p93, %p94
      %p96 = scmp.ne.s32.totalorder %s85, %s86
      %p97 = scmp.eq.s32.totalorder %s27, 0
      %p98 = por %p96, %p97
      %p99 = scmp.ne.s32.totalorder %s85, %s86
      %p100 = scmp.eq.s32.totalorder %s28, 1
      %p101 = por %p99, %p100
      %p103 = scmp.ne.s32.totalorder %s86, %s102
      %p104 = scmp.eq.s32.totalorder %s28, 0
      %p105 = por %p103, %p104
      %s106 = ssub.s32 %s29, %s41
      %p107 = scmp.eq.s32.totalorder %s106, 0
      %s109 = sadd.s32 %s108, 1
      %s110 = scalar_select %p107, %s108, %s109
      %p113 = pneg %p107
      %p114 = scmp.eq.s32.totalorder %s22, 1
      %p115 = por %p113, %p114
      %p116 = scmp.ne.s32.totalorder %s108, %s111
      %p117 = scmp.eq.s32.totalorder %s22, 0
      %p118 = por %p116, %p117
      %p119 = scmp.ne.s32.totalorder %s108, %s111
      %p120 = scmp.eq.s32.totalorder %s27, 1
      %p121 = por %p119, %p120
      %p122 = scmp.ne.s32.totalorder %s111, %s112
      %p123 = scmp.eq.s32.totalorder %s27, 0
      %p124 = por %p122, %p123
      %p125 = scmp.ne.s32.totalorder %s111, %s112
      %p126 = scmp.eq.s32.totalorder %s28, 1
      %p127 = por %p125, %p126
      %p129 = scmp.ne.s32.totalorder %s112, %s128
      %p130 = scmp.eq.s32.totalorder %s28, 0
      %p131 = por %p129, %p130
      %s132 = ssub.s32 %s29, %s41
      %p133 = scmp.eq.s32.totalorder %s132, 0
      %s135 = sadd.s32 %s134, 1
      %s136 = scalar_select %p133, %s134, %s135
      %p139 = pneg %p133
      %p140 = scmp.eq.s32.totalorder %s22, 1
      %p141 = por %p139, %p140
      %p142 = scmp.ne.s32.totalorder %s134, %s137
      %p143 = scmp.eq.s32.totalorder %s22, 0
      %p144 = por %p142, %p143
      %p145 = scmp.ne.s32.totalorder %s134, %s137
      %p146 = scmp.eq.s32.totalorder %s27, 1
      %p147 = por %p145, %p146
      %p148 = scmp.ne.s32.totalorder %s137, %s138
      %p149 = scmp.eq.s32.totalorder %s27, 0
      %p150 = por %p148, %p149
      %p151 = scmp.ne.s32.totalorder %s137, %s138
      %p152 = scmp.eq.s32.totalorder %s28, 1
      %p153 = por %p151, %p152
      %p155 = scmp.ne.s32.totalorder %s138, %s154
      %p156 = scmp.eq.s32.totalorder %s28, 0
      %p157 = por %p155, %p156
      %p158 = scmp.le.s32.totalorder 1, %s22
      %p159 = scmp.lt.s32.totalorder %s22, 3
      %p160 = pnand %p158, %p159
      %p161 = pneg %p160
      // Predicated region
      $region9: #{tpu_custom_call.1} parent=5 // pred_check
        _
      $region10: #{tpu_custom_call.1} parent=5 // pred_check_branch
        %163 = sbr.rel (%p160) target = $region12
      $region11: #{tpu_custom_call.1} parent=5 // pred_region
        %s164 = ssub.s32 %s22, 1
      $region12: #{tpu_custom_call.1} parent=5 // pred_fallthru
        _
      %p165 = scmp.lt.s32.totalorder %s22, 2
      // Predicated region
      $region13: #{tpu_custom_call.1} parent=5 // pred_check
        %p166 = pneg %p165
      $region14: #{tpu_custom_call.1} parent=5 // pred_check_branch
        %168 = sbr.rel (%p166) target = $region16
      $region15: #{tpu_custom_call.1} parent=5 // pred_region
        // Predicated region
        $region17: #{tpu_custom_call.1} parent=15 // pred_check
          %p169 = pneg %p60
        $region18: #{tpu_custom_call.1} parent=15 // pred_check_branch
          %171 = sbr.rel (%p169) target = $region20
        $region19: #{tpu_custom_call.1} parent=15 // pred_region
          %s172 = sand.u32 %s50, 1
          %s173 = scalar_lea.sflag [#allocation3], %s172
          %s174 = sand.u32 %s50, 1
          %s175 = smul.addr %s174, 8
          %s176 = scalar_lea.vmem [#allocation2], %s175
          %s177 = sadd.s32 %s29, %s30
          %p178 = scmp.lt.s32.totalorder %s177, 1
          %s179 = scalar_select %p178, %s177, 1
          %181 = vsyncadd %s173, 0
          %s182 = smul.addr %s179, 8
          %s183 = scalar_lea.hbm %s0, %s182
          %s185 = sshll.u32 %s183, 4
          %s186 = int_to_ptr.hbm [resolvable:$true] %s185
          %s187 = sshll.u32 %s176, 4
          %s188 = int_to_ptr.vmem [resolvable:$true] %s187
          %190 = dma.hbm_to_vmem [thread:$0]  %s186, 128, %s188, %s173
        $region20: #{tpu_custom_call.1} parent=15 // pred_fallthru
          _
        // Predicated region
        $region21: #{tpu_custom_call.1} parent=15 // pred_check
          %p191 = pneg %p92
        $region22: #{tpu_custom_call.1} parent=15 // pred_check_branch
          %193 = sbr.rel (%p191) target = $region24
        $region23: #{tpu_custom_call.1} parent=15 // pred_region
          %s194 = sand.u32 %s82, 1
          %s195 = scalar_lea.sflag [#allocation6], %s194
          %s196 = sand.u32 %s82, 1
          %s197 = smul.addr %s196, 8
          %s198 = scalar_lea.vmem [#allocation5], %s197
          %s199 = sadd.s32 %s29, %s30
          %p200 = scmp.lt.s32.totalorder %s199, 1
          %s201 = scalar_select %p200, %s199, 1
          %203 = vsyncadd %s195, 0
          %s204 = smul.addr %s201, 8
          %s205 = scalar_lea.hbm %s1, %s204
          %s207 = sshll.u32 %s205, 4
          %s208 = int_to_ptr.hbm [resolvable:$true] %s207
          %s209 = sshll.u32 %s198, 4
          %s210 = int_to_ptr.vmem [resolvable:$true] %s209
          %212 = dma.hbm_to_vmem [thread:$0]  %s208, 128, %s210, %s195
        $region24: #{tpu_custom_call.1} parent=15 // pred_fallthru
          _
      $region16: #{tpu_custom_call.1} parent=5 // pred_fallthru
        _
      %p213 = scmp.le.s32.totalorder 1, %s22
      %p214 = scmp.lt.s32.totalorder %s22, 3
      %p215 = pnand %p213, %p214
      %p216 = pneg %p215
      // Predicated region
      $region25: #{tpu_custom_call.1} parent=5 // pred_check
        _
      $region26: #{tpu_custom_call.1} parent=5 // pred_check_branch
        %218 = sbr.rel (%p215) target = $region28
      $region27: #{tpu_custom_call.1} parent=5 // pred_region
        %s219 = ssub.s32 %s22, 1
        %s220 = sand.u32 %s53, 1
        %s221 = scalar_lea.sflag [#allocation3], %s220
        %s222 = sand.u32 %s53, 1
        %s223 = smul.addr %s222, 8
        %s224 = scalar_lea.vmem [#allocation2], %s223
        // Predicated region
        $region29: #{tpu_custom_call.1} parent=27 // pred_check
          %p225 = pneg %p66
        $region30: #{tpu_custom_call.1} parent=27 // pred_check_branch
          %227 = sbr.rel (%p225) target = $region32
        $region31: #{tpu_custom_call.1} parent=27 // pred_region
          %229 = dma.done %s221, 128
        $region32: #{tpu_custom_call.1} parent=27 // pred_fallthru
          _
        %s230 = sand.u32 %s85, 1
        %s231 = scalar_lea.sflag [#allocation6], %s230
        %s232 = sand.u32 %s85, 1
        %s233 = smul.addr %s232, 8
        %s234 = scalar_lea.vmem [#allocation5], %s233
        // Predicated region
        $region33: #{tpu_custom_call.1} parent=27 // pred_check
          %p235 = pneg %p98
        $region34: #{tpu_custom_call.1} parent=27 // pred_check_branch
          %237 = sbr.rel (%p235) target = $region36
        $region35: #{tpu_custom_call.1} parent=27 // pred_region
          %239 = dma.done %s231, 128
        $region36: #{tpu_custom_call.1} parent=27 // pred_fallthru
          _
        %s240 = sand.u32 %s53, 1
        %s241 = scalar_lea.sflag [#allocation3], %s240
        %s242 = sand.u32 %s53, 1
        %s243 = smul.addr %s242, 8
        %s244 = scalar_lea.vmem [#allocation2], %s243
        %p245 = pneg %p66
        %p246 = pneg %p63
        %s247 = sand.u32 %s85, 1
        %s248 = scalar_lea.sflag [#allocation6], %s247
        %s249 = sand.u32 %s85, 1
        %s250 = smul.addr %s249, 8
        %s251 = scalar_lea.vmem [#allocation5], %s250
        %p252 = pneg %p98
        %p253 = pneg %p95
        %p254 = pneg %p124
        %p255 = pneg %p121
        %s256 = sand.u32 %s111, 1
        %s257 = scalar_lea.sflag [#allocation4], %s256
        %s258 = sand.u32 %s111, 1
        %s259 = smul.addr %s258, 8
        %s260 = scalar_lea.vmem [#allocation7], %s259
        %p261 = pneg %p150
        %p262 = pneg %p147
        %s263 = sand.u32 %s137, 1
        %s264 = scalar_lea.sflag [#allocation9], %s263
        %s265 = sand.u32 %s137, 1
        %s266 = smul.addr %s265, 8
        %s267 = scalar_lea.vmem [#allocation8], %s266
        %s268 = sadd.s32 %s31, %s32
        %p269 = scmp.lt.s32.totalorder %s268, 1
        %s270 = scalar_select %p269, %s268, 1
        %s271 = sadd.s32 %s31, %s32
        %p272 = scmp.lt.s32.totalorder %s271, 1
        %s273 = scalar_select %p272, %s271, 1
        %p274 = scmp.eq.s32.totalorder %s32, 0
        // Predicated region
        $region37: #{tpu_custom_call.1} parent=27 // pred_check
          %p275 = pneg %p274
        $region38: #{tpu_custom_call.1} parent=27 // pred_check_branch
          %277 = sbr.rel (%p275) target = $region40
        $region39: #{tpu_custom_call.1} parent=27 // pred_region
          %278 = vst [vmem:[%s260] sm:$0xff] 0.0
          %279 = vst [vmem:[%s267] sm:$0xff] 0.0
        $region40: #{tpu_custom_call.1} parent=27 // pred_fallthru
          _
        %v280 = vld [vmem:[%s224] sm:$0xff]
        %v281 = vmul.f32 %v280, 0.5
        %v282 = vtanh.pop %v281
        %v283 = vadd.f32 %v282, 1.0
        %v284 = vmul.f32 %v283, 0.5
        %v285 = vld [vmem:[%s234] sm:$0xff]
        %v286 = vmul.f32 %v284, %v285
        %v287 = vadd.f32 %v284, %v285
        %v288 = vld [vmem:[%s260] sm:$0xff]
        %v289 = vadd.f32 %v286, 0.0
        %v290 = vadd.f32 %v288, %v289
        %291 = vst [vmem:[%s260] sm:$0xff] %v290
        %v292 = vld [vmem:[%s267] sm:$0xff]
        %v293 = vadd.f32 %v287, 0.0
        %v294 = vadd.f32 %v292, %v293
        %295 = vst [vmem:[%s267] sm:$0xff] %v294
        %s296 = sand.u32 %s111, 1
        %s297 = scalar_lea.sflag [#allocation4], %s296
        %s298 = sand.u32 %s111, 1
        %s299 = smul.addr %s298, 8
        %s300 = scalar_lea.vmem [#allocation7], %s299
        %s301 = sand.u32 %s137, 1
        %s302 = scalar_lea.sflag [#allocation9], %s301
        %s303 = sand.u32 %s137, 1
        %s304 = smul.addr %s303, 8
        %s305 = scalar_lea.vmem [#allocation8], %s304
        // Predicated region
        $region41: #{tpu_custom_call.1} parent=27 // pred_check
          %p306 = pneg %p121
        $region42: #{tpu_custom_call.1} parent=27 // pred_check_branch
          %308 = sbr.rel (%p306) target = $region44
        $region43: #{tpu_custom_call.1} parent=27 // pred_region
          %310 = vsyncadd %s297, 0
          %s311 = smul.addr %s31, 8
          %s312 = scalar_lea.hbm %s2, %s311
          %s314 = sshll.u32 %s300, 4
          %s315 = int_to_ptr.vmem [resolvable:$true] %s314
          %s316 = sshll.u32 %s312, 4
          %s317 = int_to_ptr.hbm [resolvable:$true] %s316
          %319 = dma.vmem_to_hbm [thread:$0]  %s315, 128, %s317, %s297
        $region44: #{tpu_custom_call.1} parent=27 // pred_fallthru
          _
        // Predicated region
        $region45: #{tpu_custom_call.1} parent=27 // pred_check
          %p320 = pneg %p147
        $region46: #{tpu_custom_call.1} parent=27 // pred_check_branch
          %322 = sbr.rel (%p320) target = $region48
        $region47: #{tpu_custom_call.1} parent=27 // pred_region
          %324 = vsyncadd %s302, 0
          %s325 = smul.addr %s31, 8
          %s326 = scalar_lea.hbm %s3, %s325
          %s328 = sshll.u32 %s305, 4
          %s329 = int_to_ptr.vmem [resolvable:$true] %s328
          %s330 = sshll.u32 %s326, 4
          %s331 = int_to_ptr.hbm [resolvable:$true] %s330
          %333 = dma.vmem_to_hbm [thread:$0]  %s329, 128, %s331, %s302
        $region48: #{tpu_custom_call.1} parent=27 // pred_fallthru
          _
      $region28: #{tpu_custom_call.1} parent=5 // pred_fallthru
        _
      %p334 = scmp.le.s32.totalorder 2, %s22
      // Predicated region
      $region49: #{tpu_custom_call.1} parent=5 // pred_check
        %p335 = pneg %p334
      $region50: #{tpu_custom_call.1} parent=5 // pred_check_branch
        %337 = sbr.rel (%p335) target = $region52
      $region51: #{tpu_custom_call.1} parent=5 // pred_region
        %s338 = ssub.s32 %s22, 2
        // Predicated region
        $region53: #{tpu_custom_call.1} parent=51 // pred_check
          %p339 = pneg %p127
        $region54: #{tpu_custom_call.1} parent=51 // pred_check_branch
          %341 = sbr.rel (%p339) target = $region56
        $region55: #{tpu_custom_call.1} parent=51 // pred_region
          %s342 = sand.u32 %s112, 1
          %s343 = scalar_lea.sflag [#allocation4], %s342
          %s344 = sand.u32 %s112, 1
          %s345 = smul.addr %s344, 8
          %s346 = scalar_lea.vmem [#allocation7], %s345
          %348 = dma.done %s343, 128
        $region56: #{tpu_custom_call.1} parent=51 // pred_fallthru
          _
        // Predicated region
        $region57: #{tpu_custom_call.1} parent=51 // pred_check
          %p349 = pneg %p153
        $region58: #{tpu_custom_call.1} parent=51 // pred_check_branch
          %351 = sbr.rel (%p349) target = $region60
        $region59: #{tpu_custom_call.1} parent=51 // pred_region
          %s352 = sand.u32 %s138, 1
          %s353 = scalar_lea.sflag [#allocation9], %s352
          %s354 = sand.u32 %s138, 1
          %s355 = smul.addr %s354, 8
          %s356 = scalar_lea.vmem [#allocation8], %s355
          %358 = dma.done %s353, 128
        $region60: #{tpu_custom_call.1} parent=51 // pred_fallthru
          _
      $region52: #{tpu_custom_call.1} parent=5 // pred_fallthru
        _
    $region6: #{tpu_custom_call.1} parent=1 // loop_footer
      %s26 = sadd.s32 1, %s22
    $region7: #{tpu_custom_call.1} parent=1 // loop_footer_branch
      %21 = sbr.rel target = $region3
    $region8: #{tpu_custom_call.1} parent=1 // loop_exit
      _
    %359 = vsyncpa [#allocation3], 1
    %s360 = scalar_lea.sflag [#allocation3], 1
    %361 = vsyncpa %s360, 1
    %362 = vsyncpa [#allocation6], 1
    %s363 = scalar_lea.sflag [#allocation6], 1
    %364 = vsyncpa %s363, 1
    %365 = vsyncpa [#allocation4], 1
    %s366 = scalar_lea.sflag [#allocation4], 1
    %367 = vsyncpa %s366, 1
    %368 = vsyncpa [#allocation9], 1
    %s369 = scalar_lea.sflag [#allocation9], 1
    %370 = vsyncpa %s369, 1

</llo_original>
